<compile_context>
chip_gen: v5e
topology: v5e:2x2
jax: 0.10.0
libtpu: 0.0.40
codegen_flags: <defaults>
</compile_context>

<pallas_src>
import jax
import jax.numpy as jnp
from jax.experimental import pallas as pl
from jax.experimental.pallas import tpu as pltpu


def _round_up(x, m):
    return ((x + m - 1) // m) * m


def _cdiv(a, b):
    return (a + b - 1) // b


def _vmem_capacity_bytes():
    """Physical per-core VMEM; conservative 64 MiB (v7x) fallback."""
    try:
        info = pltpu.get_tpu_info()
        return int(getattr(info, "vmem_capacity_bytes", 64 * 1024 * 1024))
    except Exception:
        return 64 * 1024 * 1024


def gnn_graph_head_forward(node_feature, batch_idx, graph_label, w, b,
                           num_graphs, *, target_tile_bytes=2 * 1024 * 1024):
    """Mirrors GNNGraphHead.forward: returns (pred, graph_label).

    pred[g] = (sum_{i : batch_idx[i]==g} node_feature[i]) @ W + b
    `num_graphs` must be a static Python int.
    """
    n_nodes, dim_in = node_feature.shape
    dim_out = w.shape[1]
    x_dtype = node_feature.dtype
    num_graphs = int(num_graphs)

    # Degenerate batch: pooled features are all-zero -> pred is just the bias.
    if n_nodes == 0 or num_graphs == 0:
        pred = jnp.broadcast_to(b.astype(jnp.float32).reshape(1, dim_out),
                                (num_graphs, dim_out))
        return pred, graph_label

    itemsize = jnp.dtype(x_dtype).itemsize
    w_itemsize = jnp.dtype(w.dtype).itemsize

    # ---- generation-aware VMEM budget --------------------------------------
    vmem_cap = _vmem_capacity_bytes()        # 128 MiB v5e/v6e, 64 MiB v7x per TC
    vmem_budget = int(vmem_cap * 0.75)       # explicit headroom

    # ---- TPU-friendly shapes / tiling ---------------------------------------
    g_pad = _round_up(max(num_graphs, 1), 8)        # sublane-aligned graph axis
    d_out_pad = _round_up(max(dim_out, 1), 128)     # lane-dense output

    # Node-tile rows from a byte budget: amortizes the ~0.35 us per-grid-step
    # overhead when D_in is small and bounds VMEM when D_in is large.  Kept a
    # multiple of 128 so the (1, tile) seg block stays lane-aligned.
    tile_bytes = min(int(target_tile_bytes), vmem_budget // 8)
    rows = max(tile_bytes // max(dim_in * itemsize, 1), 128)
    tile = max((rows // 128) * 128, 128)
    tile = min(tile, _round_up(n_nodes, 128))

    n_tiles = _cdiv(n_nodes, tile)
    # Leading 'parallel' axis: 2 node super-chunks so v7x's 2nd TensorCore (and
    # its DMA stream) participates; runs sequentially (still correct) on 1-TC chips.
    n_split = 2 if n_tiles >= 2 else 1
    tiles_per_chunk = _cdiv(n_tiles, n_split)
    n_tiles_total = n_split * tiles_per_chunk
    n_seg = n_tiles_total * tile
    last_tile = (n_nodes - 1) // tile               # last tile holding real rows

    # ---- host-side prep (node_feature itself is NOT copied / padded) --------
    seg_p = (jnp.full((1, n_seg), -1, dtype=jnp.int32)
             .at[0, :n_nodes].set(batch_idx.astype(jnp.int32)))

    if d_out_pad == dim_out:
        w_p = w                                              # native dtype, no copy
        b_p = b.astype(jnp.float32).reshape(1, d_out_pad)
    else:
        w_p = (jnp.zeros((dim_in, d_out_pad), dtype=w.dtype)
               .at[:, :dim_out].set(w))
        b_p = (jnp.zeros((1, d_out_pad), dtype=jnp.float32)
               .at[0, :dim_out].set(b.astype(jnp.float32)))

    # ---- kernel --------------------------------------------------------------
    def kernel(x_ref, seg_ref, w_hbm, b_hbm, o_ref,
               acc_ref, gid_ref, w_vmem, b_vmem, sem):
        c = pl.program_id(0)              # parallel super-chunk (megacore)
        k = pl.program_id(1)              # node-tile index within the chunk
        n_k = pl.num_programs(1)

        @pl.when(k == 0)
        def _init():
            acc_ref[...] = jnp.zeros_like(acc_ref)
            gid_ref[...] = jax.lax.broadcasted_iota(jnp.int32, gid_ref.shape, 0)
            # W / b are only consumed in the epilogue: start their DMA now so it
            # overlaps all of this chunk's pooling work.
            pltpu.make_async_copy(w_hbm, w_vmem, sem.at[0]).start()
            pltpu.make_async_copy(b_hbm, b_vmem, sem.at[1]).start()

        # ---- pooling: one-hot [G_pad, tile] @ x [tile, D_in] on the MXU -----
        x = x_ref[...]                                        # [tile, D_in]
        # Zero rows past n_nodes (ragged last tile / clamped duplicate tile).
        # jnp.where (not x*mask) so garbage NaN/Inf in the tail cannot leak in.
        row0 = (c * tiles_per_chunk + k) * tile
        row_ids = row0 + jax.lax.broadcasted_iota(jnp.int32, (tile, 1), 0)
        x = jnp.where(row_ids < n_nodes, x, jnp.zeros_like(x))

        seg = seg_ref[...]                                    # [1, tile] int32
        onehot = (gid_ref[...] == seg).astype(x.dtype)        # [G_pad, tile]
        acc_ref[...] += jnp.dot(onehot, x, preferred_element_type=jnp.float32)

        # ---- epilogue: post-MP Linear, once per super-chunk ------------------
        @pl.when(k == n_k - 1)
        def _epilogue():
            pltpu.make_async_copy(w_hbm, w_vmem, sem.at[0]).wait()
            pltpu.make_async_copy(b_hbm, b_vmem, sem.at[1]).wait()
            out = jnp.dot(acc_ref[...], w_vmem[...],
                          preferred_element_type=jnp.float32)
            # bias only on chunk 0: the wrapper sums the per-chunk slabs.
            out = out + b_vmem[...] * (c == 0).astype(jnp.float32)
            o_ref[0, :, :] = out.astype(o_ref.dtype)

    # ---- VMEM accounting / cost hints ----------------------------------------
    vmem_est = (2 * tile * dim_in * itemsize        # double-buffered x tiles
                + 2 * tile * 4                      # double-buffered seg tiles
                + dim_in * d_out_pad * w_itemsize   # W scratch (single copy, native dtype)
                + d_out_pad * 4                     # b scratch
                + 2 * g_pad * d_out_pad * 4         # output block
                + g_pad * dim_in * 4                # pooled accumulator
                + g_pad * 4)                        # hoisted graph-id iota
    vmem_limit = min(max(int(1.5 * vmem_est), 32 * 1024 * 1024), vmem_budget)
    vmem_limit = max(vmem_limit, int(vmem_est) + (2 << 20))
    vmem_limit = min(vmem_limit, vmem_cap)

    cost = pl.CostEstimate(
        flops=2 * g_pad * n_seg * dim_in + 2 * n_split * g_pad * dim_in * d_out_pad,
        transcendentals=0,
        bytes_accessed=int(n_seg * dim_in * itemsize + n_seg * 4
                           + dim_in * d_out_pad * w_itemsize + d_out_pad * 4
                           + n_split * g_pad * d_out_pad * 4),
    )

    pred_slabs = pl.pallas_call(
        kernel,
        out_shape=jax.ShapeDtypeStruct((n_split, g_pad, d_out_pad), jnp.float32),
        grid=(n_split, tiles_per_chunk),
        in_specs=[
            # node features: unpadded; fully-OOB tile indices clamped to the
            # last real tile (those rows are masked to zero in-kernel anyway).
            pl.BlockSpec(
                (tile, dim_in),
                lambda c, k: (jnp.minimum(c * tiles_per_chunk + k, last_tile), 0)),
            # graph ids, padded with -1 up to n_seg
            pl.BlockSpec((1, tile), lambda c, k: (0, c * tiles_per_chunk + k)),
            # W / b stay in HBM; manually DMA'd into VMEM scratch once per chunk
            pl.BlockSpec(memory_space=pl.ANY),
            pl.BlockSpec(memory_space=pl.ANY),
        ],
        out_specs=pl.BlockSpec((1, g_pad, d_out_pad), lambda c, k: (c, 0, 0)),
        scratch_shapes=[
            pltpu.VMEM((g_pad, dim_in), jnp.float32),    # pooled-feature accumulator
            pltpu.VMEM((g_pad, 1), jnp.int32),           # hoisted graph-id iota
            pltpu.VMEM((dim_in, d_out_pad), w_p.dtype),  # W (native dtype)
            pltpu.VMEM((1, d_out_pad), jnp.float32),     # b
            pltpu.SemaphoreType.DMA((2,)),
        ],
        compiler_params=pltpu.CompilerParams(
            dimension_semantics=("parallel", "arbitrary"),
            vmem_limit_bytes=int(vmem_limit),
        ),
        cost_estimate=cost,
    )(node_feature, seg_p, w_p, b_p)

    # Sum the per-chunk partial slabs (bias was added only on slab 0) and slice
    # off alignment padding.  _apply_index: (batch.graph_feature, batch.graph_label).
    pred = pred_slabs.sum(axis=0)[:num_graphs, :dim_out]
    return pred, graph_label


def _reference(node_feature, batch_idx, w, b, num_graphs):
    pooled = jax.ops.segment_sum(node_feature.astype(jnp.float32),
                                 batch_idx, num_segments=num_graphs)
    return pooled @ w.astype(jnp.float32) + b.astype(jnp.float32)


if __name__ == "__main__":
    key = jax.random.PRNGKey(0)
    k_x, k_w, k_b = jax.random.split(key, 3)

    # Small synthetic batch: 3 graphs, 300 nodes (ragged w.r.t. the 128-row
    # tile), dim_in=32, dim_out=4.
    num_graphs = 3
    nodes_per_graph = (100, 120, 80)
    n_nodes = sum(nodes_per_graph)
    dim_in, dim_out = 32, 4

    node_feature = jax.random.normal(k_x, (n_nodes, dim_in), dtype=jnp.float32)
    batch_idx = jnp.concatenate(
        [jnp.full((n,), g, dtype=jnp.int32) for g, n in enumerate(nodes_per_graph)])
    graph_label = jnp.arange(num_graphs, dtype=jnp.int32)

    # Deterministic Linear(dim_in, dim_out, bias=True) parameters.
    w = jax.random.normal(k_w, (dim_in, dim_out), dtype=jnp.float32) * 0.1
    b = jax.random.normal(k_b, (dim_out,), dtype=jnp.float32) * 0.1

    # Small tile target so this demo exercises multiple node tiles, the ragged
    # tail mask, the clamped out-of-bounds tile and the 2-way parallel split.
    pred, label = gnn_graph_head_forward(
        node_feature, batch_idx, graph_label, w, b, num_graphs,
        target_tile_bytes=16 * 1024)
    pred = jax.block_until_ready(pred)

    ref = _reference(node_feature, batch_idx, w, b, num_graphs)
    assert pred.shape == (num_graphs, dim_out)
    assert label.shape == (num_graphs,)
    assert jnp.allclose(pred, ref, atol=1e-4, rtol=1e-4), "mismatch vs reference"

    print("KERNEL_OK")
</pallas_src>

<mosaic_0001>
module attributes {stable_mosaic.version = 11 : i64} {
  func.func @kernel(%arg0: i32, %arg1: i32, %arg2: memref<128x32xf32, #tpu.memory_space<vmem>>, %arg3: memref<1x128xi32, #tpu.memory_space<vmem>>, %arg4: memref<32x128xf32, #tpu.memory_space<any>>, %arg5: memref<1x128xf32, #tpu.memory_space<any>>, %arg6: memref<1x8x128xf32, #tpu.memory_space<vmem>>, %arg7: memref<8x32xf32, #tpu.memory_space<vmem>>, %arg8: memref<8x1xi32, #tpu.memory_space<vmem>>, %arg9: memref<32x128xf32, #tpu.memory_space<vmem>>, %arg10: memref<1x128xf32, #tpu.memory_space<vmem>>, %arg11: memref<2x!tpu.dma_semaphore, #tpu.memory_space<semaphore_mem>>) attributes {dimension_semantics = [#tpu.dimension_semantics<parallel>, #tpu.dimension_semantics<arbitrary>], iteration_bounds = array<i64: 2, 2>, scalar_prefetch = 0 : i64, scratch_operands = 5 : i64, tpu.core_type = #tpu.core_type<tc>, window_params = [{transform_indices = @transform_0, window_bounds = array<i64: 128, 32>}, {transform_indices = @transform_1, window_bounds = array<i64: 1, 128>}, {}, {}, {transform_indices = @transform_4, window_bounds = array<i64: 1, 8, 128>}]} {
    %c0_i32 = arith.constant 0 : i32
    %0 = arith.cmpi eq, %arg1, %c0_i32 : i32
    %1 = arith.extui %0 : i1 to i32
    %c0_i32_0 = arith.constant 0 : i32
    %2 = arith.cmpi ne, %1, %c0_i32_0 : i32
    scf.if %2 {
      %cst_12 = arith.constant 0.000000e+00 : f32
      %30 = vector.broadcast %cst_12 : f32 to vector<8x32xf32>
      %c0_13 = arith.constant 0 : index
      %c0_14 = arith.constant 0 : index
      %31 = vector.load %arg7[%c0_13, %c0_14] : memref<8x32xf32, #tpu.memory_space<vmem>>, vector<8x32xf32>
      tpu.vector_store %arg7[%c0_13, %c0_14], %30 {strides = array<i32>} : memref<8x32xf32, #tpu.memory_space<vmem>>, vector<8x32xf32>,
      %32 = tpu.iota {dimensions = array<i32: 0>} : vector<8x1xi32>
      %c0_15 = arith.constant 0 : index
      %c0_16 = arith.constant 0 : index
      %33 = vector.load %arg8[%c0_15, %c0_16] : memref<8x1xi32, #tpu.memory_space<vmem>>, vector<8x1xi32>
      tpu.vector_store %arg8[%c0_15, %c0_16], %32 {strides = array<i32>} : memref<8x1xi32, #tpu.memory_space<vmem>>, vector<8x1xi32>,
      %c0_i32_17 = arith.constant 0 : i32
      %34 = tpu.memref_slice %arg11[%c0_i32_17] : memref<2x!tpu.dma_semaphore, #tpu.memory_space<semaphore_mem>> -> memref<1x!tpu.dma_semaphore, #tpu.memory_space<semaphore_mem>>
      %35 = tpu.memref_squeeze %34 : memref<1x!tpu.dma_semaphore, #tpu.memory_space<semaphore_mem>> -> memref<!tpu.dma_semaphore, #tpu.memory_space<semaphore_mem>>
      tpu.enqueue_dma source(%arg4 : memref<32x128xf32, #tpu.memory_space<any>>) target(%arg9 : memref<32x128xf32, #tpu.memory_space<vmem>>) target_semaphore(%35 : memref<!tpu.dma_semaphore, #tpu.memory_space<semaphore_mem>>)
      %c1_i32_18 = arith.constant 1 : i32
      %36 = tpu.memref_slice %arg11[%c1_i32_18] : memref<2x!tpu.dma_semaphore, #tpu.memory_space<semaphore_mem>> -> memref<1x!tpu.dma_semaphore, #tpu.memory_space<semaphore_mem>>
      %37 = tpu.memref_squeeze %36 : memref<1x!tpu.dma_semaphore, #tpu.memory_space<semaphore_mem>> -> memref<!tpu.dma_semaphore, #tpu.memory_space<semaphore_mem>>
      tpu.enqueue_dma source(%arg5 : memref<1x128xf32, #tpu.memory_space<any>>) target(%arg10 : memref<1x128xf32, #tpu.memory_space<vmem>>) target_semaphore(%37 : memref<!tpu.dma_semaphore, #tpu.memory_space<semaphore_mem>>)
    } else {
    }
    %c0 = arith.constant 0 : index
    %c0_1 = arith.constant 0 : index
    %3 = vector.load %arg2[%c0, %c0_1] : memref<128x32xf32, #tpu.memory_space<vmem>>, vector<128x32xf32>
    %c2_i32 = arith.constant 2 : i32
    %4 = arith.muli %arg0, %c2_i32 : i32
    %5 = arith.addi %4, %arg1 : i32
    %c128_i32 = arith.constant 128 : i32
    %6 = arith.muli %5, %c128_i32 : i32
    %7 = tpu.iota {dimensions = array<i32: 0>} : vector<128x1xi32>
    %8 = vector.broadcast %6 : i32 to vector<128x1xi32>
    %9 = arith.addi %8, %7 : vector<128x1xi32>
    %c300_i32 = arith.constant 300 : i32
    %10 = vector.broadcast %c300_i32 : i32 to vector<128x1xi32>
    %11 = arith.cmpi slt, %9, %10 : vector<128x1xi32>
    %cst = arith.constant 0.000000e+00 : f32
    %12 = vector.broadcast %cst : f32 to vector<128x32xf32>
    %13 = vector.shape_cast %11 : vector<128x1xi1> to vector<128x1xi1>
    %14 = vector.broadcast %13 : vector<128x1xi1> to vector<128x32xi1>
    %15 = arith.select %14, %3, %12 : vector<128x32xi1>, vector<128x32xf32>
    %c0_2 = arith.constant 0 : index
    %c0_3 = arith.constant 0 : index
    %16 = vector.load %arg3[%c0_2, %c0_3] : memref<1x128xi32, #tpu.memory_space<vmem>>, vector<1x128xi32>
    %c0_4 = arith.constant 0 : index
    %c0_5 = arith.constant 0 : index
    %17 = vector.load %arg8[%c0_4, %c0_5] : memref<8x1xi32, #tpu.memory_space<vmem>>, vector<8x1xi32>
    %18 = vector.broadcast %17 : vector<8x1xi32> to vector<8x128xi32>
    %19 = vector.broadcast %16 : vector<1x128xi32> to vector<8x128xi32>
    %20 = arith.cmpi eq, %18, %19 : vector<8x128xi32>
    %21 = arith.extui %20 : vector<8x128xi1> to vector<8x128xi32>
    %22 = arith.sitofp %21 : vector<8x128xi32> to vector<8x128xf32>
    %c0_6 = arith.constant 0 : index
    %c0_7 = arith.constant 0 : index
    %23 = vector.load %arg7[%c0_6, %c0_7] : memref<8x32xf32, #tpu.memory_space<vmem>>, vector<8x32xf32>
    %cst_8 = arith.constant dense<0.000000e+00> : vector<8x32xf32>
    %24 = tpu.matmul %22, %15, %cst_8 {dimension_numbers = #tpu.dot_dimension_numbers<[1], [0], [0], [1], [0, 0, 1, 1], [], []>} : vector<8x128xf32>, vector<128x32xf32>, vector<8x32xf32> -> vector<8x32xf32>
    %25 = arith.addf %23, %24 : vector<8x32xf32>
    %c0_9 = arith.constant 0 : index
    %c0_10 = arith.constant 0 : index
    %26 = vector.load %arg7[%c0_9, %c0_10] : memref<8x32xf32, #tpu.memory_space<vmem>>, vector<8x32xf32>
    tpu.vector_store %arg7[%c0_9, %c0_10], %25 {strides = array<i32>} : memref<8x32xf32, #tpu.memory_space<vmem>>, vector<8x32xf32>,
    %c1_i32 = arith.constant 1 : i32
    %27 = arith.cmpi eq, %arg1, %c1_i32 : i32
    %28 = arith.extui %27 : i1 to i32
    %c0_i32_11 = arith.constant 0 : i32
    %29 = arith.cmpi ne, %28, %c0_i32_11 : i32
    scf.if %29 {
      %c0_i32_12 = arith.constant 0 : i32
      %30 = tpu.memref_slice %arg11[%c0_i32_12] : memref<2x!tpu.dma_semaphore, #tpu.memory_space<semaphore_mem>> -> memref<1x!tpu.dma_semaphore, #tpu.memory_space<semaphore_mem>>
      %31 = tpu.memref_squeeze %30 : memref<1x!tpu.dma_semaphore, #tpu.memory_space<semaphore_mem>> -> memref<!tpu.dma_semaphore, #tpu.memory_space<semaphore_mem>>
      tpu.wait_dma2 semaphore(%31 : memref<!tpu.dma_semaphore, #tpu.memory_space<semaphore_mem>>) src(%arg4 : memref<32x128xf32, #tpu.memory_space<any>>) dst(%arg9 : memref<32x128xf32, #tpu.memory_space<vmem>>)
      %c1_i32_13 = arith.constant 1 : i32
      %32 = tpu.memref_slice %arg11[%c1_i32_13] : memref<2x!tpu.dma_semaphore, #tpu.memory_space<semaphore_mem>> -> memref<1x!tpu.dma_semaphore, #tpu.memory_space<semaphore_mem>>
      %33 = tpu.memref_squeeze %32 : memref<1x!tpu.dma_semaphore, #tpu.memory_space<semaphore_mem>> -> memref<!tpu.dma_semaphore, #tpu.memory_space<semaphore_mem>>
      tpu.wait_dma2 semaphore(%33 : memref<!tpu.dma_semaphore, #tpu.memory_space<semaphore_mem>>) src(%arg5 : memref<1x128xf32, #tpu.memory_space<any>>) dst(%arg10 : memref<1x128xf32, #tpu.memory_space<vmem>>)
      %c0_14 = arith.constant 0 : index
      %c0_15 = arith.constant 0 : index
      %34 = vector.load %arg7[%c0_14, %c0_15] : memref<8x32xf32, #tpu.memory_space<vmem>>, vector<8x32xf32>
      %c0_16 = arith.constant 0 : index
      %c0_17 = arith.constant 0 : index
      %35 = vector.load %arg9[%c0_16, %c0_17] : memref<32x128xf32, #tpu.memory_space<vmem>>, vector<32x128xf32>
      %cst_18 = arith.constant dense<0.000000e+00> : vector<8x128xf32>
      %36 = tpu.matmul %34, %35, %cst_18 {dimension_numbers = #tpu.dot_dimension_numbers<[1], [0], [0], [1], [0, 0, 1, 1], [], []>} : vector<8x32xf32>, vector<32x128xf32>, vector<8x128xf32> -> vector<8x128xf32>
      %c0_19 = arith.constant 0 : index
      %c0_20 = arith.constant 0 : index
      %37 = vector.load %arg10[%c0_19, %c0_20] : memref<1x128xf32, #tpu.memory_space<vmem>>, vector<1x128xf32>
      %c0_i32_21 = arith.constant 0 : i32
      %38 = arith.cmpi eq, %arg0, %c0_i32_21 : i32
      %39 = arith.extui %38 : i1 to i32
      %40 = arith.sitofp %39 : i32 to f32
      %41 = vector.broadcast %40 : f32 to vector<1x128xf32>
      %42 = arith.mulf %37, %41 : vector<1x128xf32>
      %43 = vector.broadcast %42 : vector<1x128xf32> to vector<8x128xf32>
      %44 = arith.addf %36, %43 : vector<8x128xf32>
      %c0_22 = arith.constant 0 : index
      %c0_23 = arith.constant 0 : index
      %c0_24 = arith.constant 0 : index
      %45 = vector.load %arg6[%c0_22, %c0_23, %c0_24] : memref<1x8x128xf32, #tpu.memory_space<vmem>>, vector<1x8x128xf32>
      %46 = vector.shape_cast %45 : vector<1x8x128xf32> to vector<8x128xf32>
      %47 = vector.shape_cast %44 : vector<8x128xf32> to vector<1x8x128xf32>
      tpu.vector_store %arg6[%c0_22, %c0_23, %c0_24], %47 {strides = array<i32>} : memref<1x8x128xf32, #tpu.memory_space<vmem>>, vector<1x8x128xf32>,
    } else {
    }
    return
  }
  func.func @transform_0(%arg0: i32, %arg1: i32) -> (i32, i32) {
    %c2_i32 = arith.constant 2 : i32
    %0 = arith.muli %arg0, %c2_i32 : i32
    %1 = arith.addi %0, %arg1 : i32
    %c2_i32_0 = arith.constant 2 : i32
    %2 = arith.minsi %1, %c2_i32_0 : i32
    %c0_i32 = arith.constant 0 : i32
    %c0_i32_1 = arith.constant 0 : i32
    return %2, %c0_i32 : i32, i32
  }
  func.func @transform_1(%arg0: i32, %arg1: i32) -> (i32, i32) {
    %c2_i32 = arith.constant 2 : i32
    %0 = arith.muli %arg0, %c2_i32 : i32
    %1 = arith.addi %0, %arg1 : i32
    %c0_i32 = arith.constant 0 : i32
    %c0_i32_0 = arith.constant 0 : i32
    return %c0_i32, %1 : i32, i32
  }
  func.func @transform_4(%arg0: i32, %arg1: i32) -> (i32, i32, i32) {
    %c0_i32 = arith.constant 0 : i32
    %c0_i32_0 = arith.constant 0 : i32
    %c0_i32_1 = arith.constant 0 : i32
    return %arg0, %c0_i32, %c0_i32_0 : i32, i32, i32
  }
}

</mosaic_0001>

<llo_original>
// kernel: tpu_custom_call.1
$region0: #{tpu_custom_call.1}
  #allocation0 [shape = 'u32[]', space=smem, size = 0x4, offset = 0x4, fixed_abs, tag = 'smem constant byte address 0x4 - core index']
  #allocation1 [shape = 'u32[72,128]{1,0:T(1,128)}', space=vmem, size = 0x9000, scoped, tag = 'internal scratch']
  #allocation2 [shape = 'f32[8,32]{1,0:T(8,128)}', space=vmem, size = 0x1000, scoped, tag = 'scratch operand']
  #allocation3 [shape = 's32[8,1]{1,0:T(8,128)}', space=vmem, size = 0x1000, scoped, tag = 'scratch operand']
  #allocation4 [shape = 'f32[32,128]{1,0:T(8,128)}', space=vmem, size = 0x4000, scoped, tag = 'scratch operand']
  #allocation5 [shape = 'f32[1,128]{1,0:T(1,128)}', space=vmem, size = 0x200, scoped, tag = 'scratch operand']
  #allocation6 [shape = 's32[2]{0}', space=sflag, size = 0x8, scoped, tag = 'scratch operand']
  #allocation9 [shape = 's32[]', space=sflag, size = 0x4, offset = 0, fixed_abs, tag = 'sflag constant byte address 0x0 - dummy sync flag']
  #allocation10 [shape = 's32[]', space=sflag, size = 0x4, offset = 0, fixed_abs, tag = 'sflag constant byte address 0x0 - dummy sync flag']
  %s0 = inlined_call_operand.vmem [shape: f32[300,32], index: 0, kind: input, shape index: {}]
  %s1 = inlined_call_operand.vmem [shape: s32[1,512], index: 1, kind: input, shape index: {}]
  %s2 = inlined_call_operand.vmem [shape: f32[32,128], index: 2, kind: input, shape index: {}]
  %s3 = inlined_call_operand.vmem [shape: f32[1,128], index: 3, kind: input, shape index: {}]
  %s4 = inlined_call_operand.hbm [shape: f32[2,8,128], index: 4, kind: output, shape index: {}]
  %s5 = sld [smem:[#allocation0]]
  $region98: #{tpu_custom_call.1} parent=0
    _
  %s7 = ssub.s32 1, %s5
  %s8 = scalar_select 0, %s7, %s5
  $region1: #{tpu_custom_call.1} parent=0
    #allocation7 [shape = 'u8[8192]{0}', space=vmem, size = 0x2000, scoped, tag = 'output window, operand 0']
    #allocation8 [shape = 's32[2]{0}', space=sflag, size = 0x8, scoped, tag = 'scoped memory for tpu_custom_call.1']
    %9 = vsyncpa [#allocation8], 0
    %s10 = scalar_lea.sflag [#allocation8], 1
    %11 = vsyncpa %s10, 0
    loop: start=0, step=1, limit=6
    $region2: #{tpu_custom_call.1} parent=1 // loop_pre_header
      _
    $region3: #{tpu_custom_call.1} parent=1 // loop_header
      %s13 = sphi 0, %s17
      %p14 = scmp.ge.s32.totalorder %s13, 6
      %s20 = sphi 0, %s32
      %s21 = sphi 0, %s28
      %s22 = sphi 0, %s20
      %s23 = sphi 0, %s21
      %s24 = sphi 0, %s22
      %s25 = sphi 0, %s23
      %s43 = sphi 0, %s45
      %s46 = sphi 0, %s43
      %s47 = sphi 0, %s46
      %s63 = sphi 0, %s47
      %s73 = sphi 0, %s75
      %s76 = sphi 0, %s73
      %s77 = sphi 0, %s76
      %s93 = sphi 0, %s77
      %s99 = sphi 0, %s101
      %s102 = sphi 0, %s99
      %s103 = sphi 0, %s102
      %s119 = sphi 0, %s103
    $region4: #{tpu_custom_call.1} parent=1 // loop_header_branch
      %16 = sbr.rel (%p14) target = $region8
    $region5: #{tpu_custom_call.1} parent=1 // loop_body
      %s18 = ssub.s32 %s13, 1
      %s19 = ssub.s32 %s13, 2
      %s26 = sadd.s32 1, %s21
      %p27 = scmp.ge.s32.totalorder %s26, 2
      %s28 = scalar_select %p27, 0, %s26
      %s29 = sadd.s32 1, %s20
      %s30 = scalar_select %p27, %s29, %s20
      %p31 = scmp.ge.s32.totalorder %s30, 2
      %s32 = scalar_select %p31, 0, %s30
      %s33 = smul.u32 %s20, 2
      %s34 = sadd.s32 %s33, %s21
      %p35 = scmp.lt.s32.totalorder %s34, 2
      %s36 = scalar_select %p35, %s34, 2
      %s37 = smul.u32 %s32, 2
      %s38 = sadd.s32 %s37, %s28
      %p39 = scmp.lt.s32.totalorder %s38, 2
      %s40 = scalar_select %p39, %s38, 2
      %s41 = ssub.s32 %s36, %s40
      %p42 = scmp.eq.s32.totalorder %s41, 0
      %s44 = sadd.s32 %s43, 1
      %s45 = scalar_select %p42, %s43, %s44
      %p48 = pneg %p42
      %p49 = scmp.eq.s32.totalorder %s13, 3
      %p50 = por %p48, %p49
      %p51 = scmp.ne.s32.totalorder %s43, %s46
      %p52 = scmp.eq.s32.totalorder %s13, 0
      %p53 = por %p51, %p52
      %p54 = scmp.ne.s32.totalorder %s43, %s46
      %p55 = scmp.eq.s32.totalorder %s18, 3
      %p56 = por %p54, %p55
      %p57 = scmp.ne.s32.totalorder %s46, %s47
      %p58 = scmp.eq.s32.totalorder %s18, 0
      %p59 = por %p57, %p58
      %p60 = scmp.ne.s32.totalorder %s46, %s47
      %p61 = scmp.eq.s32.totalorder %s19, 3
      %p62 = por %p60, %p61
      %p64 = scmp.ne.s32.totalorder %s47, %s63
      %p65 = scmp.eq.s32.totalorder %s19, 0
      %p66 = por %p64, %p65
      %s67 = smul.u32 %s20, 2
      %s68 = sadd.s32 %s67, %s21
      %s69 = smul.u32 %s32, 2
      %s70 = sadd.s32 %s69, %s28
      %s71 = ssub.s32 %s68, %s70
      %p72 = scmp.eq.s32.totalorder %s71, 0
      %s74 = sadd.s32 %s73, 1
      %s75 = scalar_select %p72, %s73, %s74
      %p78 = pneg %p72
      %p79 = scmp.eq.s32.totalorder %s13, 3
      %p80 = por %p78, %p79
      %p81 = scmp.ne.s32.totalorder %s73, %s76
      %p82 = scmp.eq.s32.totalorder %s13, 0
      %p83 = por %p81, %p82
      %p84 = scmp.ne.s32.totalorder %s73, %s76
      %p85 = scmp.eq.s32.totalorder %s18, 3
      %p86 = por %p84, %p85
      %p87 = scmp.ne.s32.totalorder %s76, %s77
      %p88 = scmp.eq.s32.totalorder %s18, 0
      %p89 = por %p87, %p88
      %p90 = scmp.ne.s32.totalorder %s76, %s77
      %p91 = scmp.eq.s32.totalorder %s19, 3
      %p92 = por %p90, %p91
      %p94 = scmp.ne.s32.totalorder %s77, %s93
      %p95 = scmp.eq.s32.totalorder %s19, 0
      %p96 = por %p94, %p95
      %s97 = ssub.s32 %s20, %s32
      %p98 = scmp.eq.s32.totalorder %s97, 0
      %s100 = sadd.s32 %s99, 1
      %s101 = scalar_select %p98, %s99, %s100
      %p104 = pneg %p98
      %p105 = scmp.eq.s32.totalorder %s13, 3
      %p106 = por %p104, %p105
      %p107 = scmp.ne.s32.totalorder %s99, %s102
      %p108 = scmp.eq.s32.totalorder %s13, 0
      %p109 = por %p107, %p108
      %p110 = scmp.ne.s32.totalorder %s99, %s102
      %p111 = scmp.eq.s32.totalorder %s18, 3
      %p112 = por %p110, %p111
      %p113 = scmp.ne.s32.totalorder %s102, %s103
      %p114 = scmp.eq.s32.totalorder %s18, 0
      %p115 = por %p113, %p114
      %p116 = scmp.ne.s32.totalorder %s102, %s103
      %p117 = scmp.eq.s32.totalorder %s19, 3
      %p118 = por %p116, %p117
      %p120 = scmp.ne.s32.totalorder %s103, %s119
      %p121 = scmp.eq.s32.totalorder %s19, 0
      %p122 = por %p120, %p121
      %p123 = scmp.le.s32.totalorder 1, %s13
      %p124 = scmp.lt.s32.totalorder %s13, 5
      %p125 = pnand %p123, %p124
      %p126 = pneg %p125
      // Predicated region
      $region9: #{tpu_custom_call.1} parent=5 // pred_check
        _
      $region10: #{tpu_custom_call.1} parent=5 // pred_check_branch
        %128 = sbr.rel (%p125) target = $region12
      $region11: #{tpu_custom_call.1} parent=5 // pred_region
        %s129 = ssub.s32 %s13, 1
      $region12: #{tpu_custom_call.1} parent=5 // pred_fallthru
        _
      %p130 = scmp.lt.s32.totalorder %s13, 4
      // Predicated region
      $region13: #{tpu_custom_call.1} parent=5 // pred_check
        %p131 = pneg %p130
      $region14: #{tpu_custom_call.1} parent=5 // pred_check_branch
        %133 = sbr.rel (%p131) target = $region16
      $region15: #{tpu_custom_call.1} parent=5 // pred_region
        // Predicated region
        $region17: #{tpu_custom_call.1} parent=15 // pred_check
          %p134 = pneg %p53
        $region18: #{tpu_custom_call.1} parent=15 // pred_check_branch
          %136 = sbr.rel (%p134) target = $region20
        $region19: #{tpu_custom_call.1} parent=15 // pred_region
          %s137 = smul.u32 %s20, 2
          %s138 = sadd.s32 %s137, %s21
          %p139 = scmp.lt.s32.totalorder %s138, 2
          %s140 = scalar_select %p139, %s138, 2
          %s141 = smul.u32 16, %s140
          %s142 = ssub.s32 38, %s141
          %p143 = scmp.lt.s32.totalorder %s142, 16
          %s144 = scalar_select %p143, %s142, 16
          %s145 = smul.u32 8, %s144
          %p146 = scmp.lt.s32.totalorder %s141, 37
          %s147 = scalar_select %p146, %s141, 37
          %s148 = smul.addr %s147, 8
          %s149 = scalar_lea.vmem %s0, %s148
          %s150 = smul.u32 %s20, 2
          %s151 = sadd.s32 %s150, %s21
          %p152 = scmp.lt.s32.totalorder %s151, 2
          %s153 = scalar_select %p152, %s151, 2
          %s154 = smul.u32 16, %s153
          %s155 = ssub.s32 38, %s154
          %p156 = scmp.lt.s32.totalorder %s155, 16
          %s157 = scalar_select %p156, %s155, 16
          %s158 = smul.u32 8, %s157
        $region20: #{tpu_custom_call.1} parent=15 // pred_fallthru
          _
        // Predicated region
        $region21: #{tpu_custom_call.1} parent=15 // pred_check
          %p159 = pneg %p83
        $region22: #{tpu_custom_call.1} parent=15 // pred_check_branch
          %161 = sbr.rel (%p159) target = $region24
        $region23: #{tpu_custom_call.1} parent=15 // pred_region
          %s162 = smul.u32 %s20, 2
          %s163 = sadd.s32 %s162, %s21
          %p164 = scmp.lt.s32.totalorder %s163, 3
          %s165 = scalar_select %p164, %s163, 3
          %s166 = scalar_lea.vmem %s1, %s165
          %s167 = smul.u32 %s20, 2
          %s168 = sadd.s32 %s167, %s21
        $region24: #{tpu_custom_call.1} parent=15 // pred_fallthru
          _
      $region16: #{tpu_custom_call.1} parent=5 // pred_fallthru
        _
      %p169 = scmp.le.s32.totalorder 1, %s13
      %p170 = scmp.lt.s32.totalorder %s13, 5
      %p171 = pnand %p169, %p170
      %p172 = pneg %p171
      // Predicated region
      $region25: #{tpu_custom_call.1} parent=5 // pred_check
        _
      $region26: #{tpu_custom_call.1} parent=5 // pred_check_branch
        %174 = sbr.rel (%p171) target = $region28
      $region27: #{tpu_custom_call.1} parent=5 // pred_region
        %s175 = ssub.s32 %s13, 1
        %s176 = smul.u32 %s22, 2
        %s177 = sadd.s32 %s176, %s23
        %p178 = scmp.lt.s32.totalorder %s177, 2
        %s179 = scalar_select %p178, %s177, 2
        %s180 = smul.u32 16, %s179
        %s181 = ssub.s32 38, %s180
        %p182 = scmp.lt.s32.totalorder %s181, 16
        %s183 = scalar_select %p182, %s181, 16
        %s184 = smul.u32 8, %s183
        %p185 = scmp.lt.s32.totalorder %s180, 37
        %s186 = scalar_select %p185, %s180, 37
        %s187 = smul.addr %s186, 8
        %s188 = scalar_lea.vmem %s0, %s187
        %p189 = pneg %p59
        %p190 = pneg %p56
        %s191 = smul.u32 %s22, 2
        %s192 = sadd.s32 %s191, %s23
        %p193 = scmp.lt.s32.totalorder %s192, 3
        %s194 = scalar_select %p193, %s192, 3
        %s195 = scalar_lea.vmem %s1, %s194
        %p196 = pneg %p89
        %p197 = pneg %p86
        %p198 = pneg %p115
        %p199 = pneg %p112
        %s200 = sand.u32 %s102, 1
        %s201 = scalar_lea.sflag [#allocation8], %s200
        %s202 = sand.u32 %s102, 1
        %s203 = smul.addr %s202, 8
        %s204 = scalar_lea.vmem [#allocation7], %s203
        %s205 = smul.u32 %s22, 2
        %s206 = sadd.s32 %s205, %s23
        %p207 = scmp.lt.s32.totalorder %s206, 2
        %s208 = scalar_select %p207, %s206, 2
        %s209 = smul.u32 16, %s208
        %s210 = ssub.s32 38, %s209
        %p211 = scmp.lt.s32.totalorder %s210, 16
        %s212 = scalar_select %p211, %s210, 16
        %s213 = smul.u32 8, %s212
        %p214 = scmp.lt.s32.totalorder %s209, 37
        %s215 = scalar_select %p214, %s209, 37
        %s216 = smul.addr %s215, 8
        %s217 = scalar_lea.vmem %s0, %s216
        %s218 = smul.u32 %s22, 2
        %s219 = sadd.s32 %s218, %s23
        %p220 = scmp.lt.s32.totalorder %s219, 2
        %s221 = scalar_select %p220, %s219, 2
        %s222 = smul.u32 16, %s221
        %s223 = ssub.s32 38, %s222
        %p224 = scmp.lt.s32.totalorder %s223, 16
        %s225 = scalar_select %p224, %s223, 16
        %s226 = smul.u32 8, %s225
        %s227 = smul.u32 %s22, 2
        %s228 = sadd.s32 %s227, %s23
        %p229 = scmp.lt.s32.totalorder %s228, 3
        %s230 = scalar_select %p229, %s228, 3
        %s231 = scalar_lea.vmem %s1, %s230
        %s232 = smul.u32 %s22, 2
        %s233 = sadd.s32 %s232, %s23
        %p234 = scmp.eq.s32.totalorder %s23, 0
        // Predicated region
        $region29: #{tpu_custom_call.1} parent=27 // pred_check
          %p235 = pneg %p234
        $region30: #{tpu_custom_call.1} parent=27 // pred_check_branch
          %237 = sbr.rel (%p235) target = $region32
        $region31: #{tpu_custom_call.1} parent=27 // pred_region
          %vm238 = vcmask 261120
          %239 = vst.msk [vmem:[#allocation2] sm:$0xff] %vm238, 0.0
          %v240 = vlaneseq
          %v241 = vshrl.u32 %v240, 7
          %vm242 = vcmask 7168
          %243 = vst.msk [vmem:[#allocation3] sm:$0xff] %vm242, %v241
          // Predicated region
          $region33: #{tpu_custom_call.1} parent=31 // pred_check
            _
          $region34: #{tpu_custom_call.1} parent=31 // pred_check_branch
            %245 = sbr.rel (0) target = $region36
          $region35: #{tpu_custom_call.1} parent=31 // pred_region
            loop: start=0, step=1, limit=1
            $region37: #{tpu_custom_call.1} parent=35 // loop_pre_header
              _
            $region38: #{tpu_custom_call.1} parent=35 // loop_header
              %s247 = sphi 0, %s251
              %p248 = scmp.ge.s32.totalorder %s247, 1
              %s252 = sphi %s2, %s2
              %s253 = sphi [#allocation4], [#allocation4]
            $region39: #{tpu_custom_call.1} parent=35 // loop_header_branch
              %250 = sbr.rel (%p248) target = $region43
            $region40: #{tpu_custom_call.1} parent=35 // loop_body
              %v254 = vld [vmem:[%s252] sm:$0xff]
              %255 = vst [vmem:[%s253] sm:$0xff] %v254
              %v256 = vld [vmem:[%s252 + $0x8] sm:$0xff]
              %257 = vst [vmem:[%s253 + $0x8] sm:$0xff] %v256
              %v258 = vld [vmem:[%s252 + $0x10] sm:$0xff]
              %259 = vst [vmem:[%s253 + $0x10] sm:$0xff] %v258
              %v260 = vld [vmem:[%s252 + $0x18] sm:$0xff]
              %261 = vst [vmem:[%s253 + $0x18] sm:$0xff] %v260
            $region41: #{tpu_custom_call.1} parent=35 // loop_footer
              %s251 = sadd.s32 1, %s247
            $region42: #{tpu_custom_call.1} parent=35 // loop_footer_branch
              %246 = sbr.rel target = $region38
            $region43: #{tpu_custom_call.1} parent=35 // loop_exit
              _
          $region36: #{tpu_custom_call.1} parent=31 // pred_fallthru
            _
          // Predicated region
          $region44: #{tpu_custom_call.1} parent=31 // pred_check
            _
          $region45: #{tpu_custom_call.1} parent=31 // pred_check_branch
            %263 = sbr.rel target = $region47
          $region46: #{tpu_custom_call.1} parent=31 // pred_region
            _
          $region47: #{tpu_custom_call.1} parent=31 // pred_fallthru
            _
          // Predicated region
          $region48: #{tpu_custom_call.1} parent=31 // pred_check
            _
          $region49: #{tpu_custom_call.1} parent=31 // pred_check_branch
            %266 = sbr.rel (0) target = $region51
          $region50: #{tpu_custom_call.1} parent=31 // pred_region
            %267 = vsyncadd [#allocation6], 512
          $region51: #{tpu_custom_call.1} parent=31 // pred_fallthru
            _
          %s268 = scalar_lea.sflag [#allocation6], 1
          // Predicated region
          $region52: #{tpu_custom_call.1} parent=31 // pred_check
            _
          $region53: #{tpu_custom_call.1} parent=31 // pred_check_branch
            %270 = sbr.rel target = $region55
          $region54: #{tpu_custom_call.1} parent=31 // pred_region
            // Predicated region
            $region67: #{tpu_custom_call.1} parent=54 // pred_check
              _
            $region68: #{tpu_custom_call.1} parent=54 // pred_check_branch
              %286 = sbr.rel (0) target = $region70
            $region69: #{tpu_custom_call.1} parent=54 // pred_region
              %s288 = ssub.s32 2, 1
              loop: start=0, step=1, limit=1
              $region71: #{tpu_custom_call.1} parent=69 // loop_pre_header
                _
              $region72: #{tpu_custom_call.1} parent=69 // loop_header
                %s290 = sphi 0, %s294
                %p291 = scmp.ge.s32.totalorder %s290, 1
                %s295 = sphi %s3, %s3
                %s296 = sphi [#allocation5], [#allocation5]
              $region73: #{tpu_custom_call.1} parent=69 // loop_header_branch
                %293 = sbr.rel (%p291) target = $region77
              $region74: #{tpu_custom_call.1} parent=69 // loop_body
                %v297 = vld [vmem:[%s295] sm:%s288]
                %298 = vst [vmem:[%s296] sm:%s288] %v297
              $region75: #{tpu_custom_call.1} parent=69 // loop_footer
                %s294 = sadd.s32 1, %s290
              $region76: #{tpu_custom_call.1} parent=69 // loop_footer_branch
                %289 = sbr.rel target = $region72
              $region77: #{tpu_custom_call.1} parent=69 // loop_exit
                _
            $region70: #{tpu_custom_call.1} parent=54 // pred_fallthru
              _
          $region55: #{tpu_custom_call.1} parent=31 // pred_fallthru
            _
          // Predicated region
          $region56: #{tpu_custom_call.1} parent=31 // pred_check
            _
          $region57: #{tpu_custom_call.1} parent=31 // pred_check_branch
            %272 = sbr.rel (0) target = $region59
          $region58: #{tpu_custom_call.1} parent=31 // pred_region
            %s274 = ssub.s32 2, 1
            loop: start=0, step=1, limit=1
            $region60: #{tpu_custom_call.1} parent=58 // loop_pre_header
              _
            $region61: #{tpu_custom_call.1} parent=58 // loop_header
              %s276 = sphi 0, %s280
              %p277 = scmp.ge.s32.totalorder %s276, 1
              %s281 = sphi %s3, %s3
              %s282 = sphi [#allocation5], [#allocation5]
            $region62: #{tpu_custom_call.1} parent=58 // loop_header_branch
              %279 = sbr.rel (%p277) target = $region66
            $region63: #{tpu_custom_call.1} parent=58 // loop_body
              %v283 = vld [vmem:[%s281] sm:%s274]
              %284 = vst [vmem:[%s282] sm:%s274] %v283
            $region64: #{tpu_custom_call.1} parent=58 // loop_footer
              %s280 = sadd.s32 1, %s276
            $region65: #{tpu_custom_call.1} parent=58 // loop_footer_branch
              %275 = sbr.rel target = $region61
            $region66: #{tpu_custom_call.1} parent=58 // loop_exit
              _
          $region59: #{tpu_custom_call.1} parent=31 // pred_fallthru
            _
          // Predicated region
          $region78: #{tpu_custom_call.1} parent=31 // pred_check
            _
          $region79: #{tpu_custom_call.1} parent=31 // pred_check_branch
            %301 = sbr.rel (0) target = $region81
          $region80: #{tpu_custom_call.1} parent=31 // pred_region
            %302 = vsyncadd %s268, 16
          $region81: #{tpu_custom_call.1} parent=31 // pred_fallthru
            _
        $region32: #{tpu_custom_call.1} parent=27 // pred_fallthru
          _
        %v303 = vld [vmem:[%s217] sm:$0xff]
        %v304 = vld [vmem:[%s217 + $0x8] sm:$0xff]
        %v305 = vld [vmem:[%s217 + $0x10] sm:$0xff]
        %v306 = vld [vmem:[%s217 + $0x18] sm:$0xff]
        %v307 = vld [vmem:[%s217 + $0x20] sm:$0xff]
        %v308 = vld [vmem:[%s217 + $0x28] sm:$0xff]
        %v309 = vld [vmem:[%s217 + $0x30] sm:$0xff]
        %v310 = vld [vmem:[%s217 + $0x38] sm:$0xff]
        %v311 = vld [vmem:[%s217 + $0x40] sm:$0xff]
        %v312 = vld [vmem:[%s217 + $0x48] sm:$0xff]
        %v313 = vld [vmem:[%s217 + $0x50] sm:$0xff]
        %v314 = vld [vmem:[%s217 + $0x58] sm:$0xff]
        %v315 = vld [vmem:[%s217 + $0x60] sm:$0xff]
        %v316 = vld [vmem:[%s217 + $0x68] sm:$0xff]
        %v317 = vld [vmem:[%s217 + $0x70] sm:$0xff]
        %v318 = vld [vmem:[%s217 + $0x78] sm:$0xff]
        %s319 = smul.u32 %s22, 2
        %s320 = sadd.s32 %s319, %s23
        %s321 = smul.u32 %s320, 128
        %v322 = vlaneseq
        %v323 = vshrl.u32 %v322, 7
        %v324 = vadd.s32 %v323, 8
        %v325 = vadd.s32 %v323, 16
        %v326 = vadd.s32 %v323, 24
        %v327 = vadd.s32 %v323, 32
        %v328 = vadd.s32 %v323, 40
        %v329 = vadd.s32 %v323, 48
        %v330 = vadd.s32 %v323, 56
        %v331 = vadd.s32 %v323, 64
        %v332 = vadd.s32 %v323, 72
        %v333 = vadd.s32 %v323, 80
        %v334 = vadd.s32 %v323, 88
        %v335 = vadd.s32 %v323, 96
        %v336 = vadd.s32 %v323, 104
        %v337 = vadd.s32 %v323, 112
        %v338 = vadd.s32 %v323, 120
        %v339 = vstv %s321
        %v340 = vadd.s32 %v339, %v323
        %v341 = vadd.s32 %v339, %v324
        %v342 = vadd.s32 %v339, %v325
        %v343 = vadd.s32 %v339, %v326
        %v344 = vadd.s32 %v339, %v327
        %v345 = vadd.s32 %v339, %v328
        %v346 = vadd.s32 %v339, %v329
        %v347 = vadd.s32 %v339, %v330
        %v348 = vadd.s32 %v339, %v331
        %v349 = vadd.s32 %v339, %v332
        %v350 = vadd.s32 %v339, %v333
        %v351 = vadd.s32 %v339, %v334
        %v352 = vadd.s32 %v339, %v335
        %v353 = vadd.s32 %v339, %v336
        %v354 = vadd.s32 %v339, %v337
        %v355 = vadd.s32 %v339, %v338
        %vm356 = vcmp.lt.s32.totalorder %v340, 300
        %vm357 = vcmp.lt.s32.totalorder %v341, 300
        %vm358 = vcmp.lt.s32.totalorder %v342, 300
        %vm359 = vcmp.lt.s32.totalorder %v343, 300
        %vm360 = vcmp.lt.s32.totalorder %v344, 300
        %vm361 = vcmp.lt.s32.totalorder %v345, 300
        %vm362 = vcmp.lt.s32.totalorder %v346, 300
        %vm363 = vcmp.lt.s32.totalorder %v347, 300
        %vm364 = vcmp.lt.s32.totalorder %v348, 300
        %vm365 = vcmp.lt.s32.totalorder %v349, 300
        %vm366 = vcmp.lt.s32.totalorder %v350, 300
        %vm367 = vcmp.lt.s32.totalorder %v351, 300
        %vm368 = vcmp.lt.s32.totalorder %v352, 300
        %vm369 = vcmp.lt.s32.totalorder %v353, 300
        %vm370 = vcmp.lt.s32.totalorder %v354, 300
        %vm371 = vcmp.lt.s32.totalorder %v355, 300
        %v372 = vsel %vm356, 1, 0
        %v373 = vsel %vm357, 1, 0
        %v374 = vsel %vm358, 1, 0
        %v375 = vsel %vm359, 1, 0
        %v376 = vsel %vm360, 1, 0
        %v377 = vsel %vm361, 1, 0
        %v378 = vsel %vm362, 1, 0
        %v379 = vsel %vm363, 1, 0
        %v380 = vsel %vm364, 1, 0
        %v381 = vsel %vm365, 1, 0
        %v382 = vsel %vm366, 1, 0
        %v383 = vsel %vm367, 1, 0
        %v384 = vsel %vm368, 1, 0
        %v385 = vsel %vm369, 1, 0
        %v386 = vsel %vm370, 1, 0
        %v387 = vsel %vm371, 1, 0
        %vm388 = vcmp.eq.s32.totalorder %v372, 1
        %vm389 = vcmp.eq.s32.totalorder %v373, 1
        %vm390 = vcmp.eq.s32.totalorder %v374, 1
        %vm391 = vcmp.eq.s32.totalorder %v375, 1
        %vm392 = vcmp.eq.s32.totalorder %v376, 1
        %vm393 = vcmp.eq.s32.totalorder %v377, 1
        %vm394 = vcmp.eq.s32.totalorder %v378, 1
        %vm395 = vcmp.eq.s32.totalorder %v379, 1
        %vm396 = vcmp.eq.s32.totalorder %v380, 1
        %vm397 = vcmp.eq.s32.totalorder %v381, 1
        %vm398 = vcmp.eq.s32.totalorder %v382, 1
        %vm399 = vcmp.eq.s32.totalorder %v383, 1
        %vm400 = vcmp.eq.s32.totalorder %v384, 1
        %vm401 = vcmp.eq.s32.totalorder %v385, 1
        %vm402 = vcmp.eq.s32.totalorder %v386, 1
        %vm403 = vcmp.eq.s32.totalorder %v387, 1
        %v404 = vsel %vm388, %v303, 0.0
        %v405 = vsel %vm389, %v304, 0.0
        %v406 = vsel %vm390, %v305, 0.0
        %v407 = vsel %vm391, %v306, 0.0
        %v408 = vsel %vm392, %v307, 0.0
        %v409 = vsel %vm393, %v308, 0.0
        %v410 = vsel %vm394, %v309, 0.0
        %v411 = vsel %vm395, %v310, 0.0
        %v412 = vsel %vm396, %v311, 0.0
        %v413 = vsel %vm397, %v312, 0.0
        %v414 = vsel %vm398, %v313, 0.0
        %v415 = vsel %vm399, %v314, 0.0
        %v416 = vsel %vm400, %v315, 0.0
        %v417 = vsel %vm401, %v316, 0.0
        %v418 = vsel %vm402, %v317, 0.0
        %v419 = vsel %vm403, %v318, 0.0
        %v420 = vld [vmem:[%s231] sm:$0x1]
        %v421 = vld [vmem:[#allocation3] sm:$0xff]
        %422 = vset.pattern.permute.xlu0 0
        %423 = vperm.xlu0 %422, %v421
        %v424 = vpop.permute.xlu0 %423
        %v425 = vperm.slane %v420, 0
        %vm426 = vcmp.eq.s32.totalorder %v424, %v425
        %v427 = vsel %vm426, 1, 0
        %v428 = vcvt.s32.f32 %v427
        %v429 = vld [vmem:[#allocation2] sm:$0xff]
        %430 = vmatpush.msra.mxu0 %v419
        %431 = vmatpush.msra.mxu0 %v418
        %432 = vmatpush.msra.mxu0 %v417
        %433 = vmatpush.msra.mxu0 %v416
        %434 = vmatpush.msra.mxu0 %v415
        %435 = vmatpush.msra.mxu0 %v414
        %436 = vmatpush.msra.mxu0 %v413
        %437 = vmatpush.msra.mxu0 %v412
        %438 = vmatpush.msra.mxu0 %v411
        %439 = vmatpush.msra.mxu0 %v410
        %440 = vmatpush.msra.mxu0 %v409
        %441 = vmatpush.msra.mxu0 %v408
        %442 = vmatpush.msra.mxu0 %v407
        %443 = vmatpush.msra.mxu0 %v406
        %444 = vmatpush.msra.mxu0 %v405
        %445 = vmatpush.msra.mxu0 %v404
        %446 = vmatmul.f32.gmra.mxu0 %v428
        %v447 = vpop.f32.mrf.mxu0
        %v448 = vadd.f32 0.0, %v447
        %449 = vdwg.mxu0
        %v450 = vadd.f32 %v429, %v448
        %vm451 = vcmask 261120
        %452 = vst.msk [vmem:[#allocation2] sm:$0xff] %vm451, %v450
        %p453 = scmp.eq.s32.totalorder %s23, 1
        // Predicated region
        $region82: #{tpu_custom_call.1} parent=27 // pred_check
          %p454 = pneg %p453
        $region83: #{tpu_custom_call.1} parent=27 // pred_check_branch
          %456 = sbr.rel (%p454) target = $region85
        $region84: #{tpu_custom_call.1} parent=27 // pred_region
          %s457 = smul.u32 32, 1
          %s458 = sshll.u32 %s457, 4
          %459 = dma.done [#allocation6], %s458
          %s460 = scalar_lea.sflag [#allocation6], 1
          %s461 = smul.u32 1, 1
          %s462 = sshll.u32 %s461, 4
          %463 = dma.done %s460, %s462
          %v464 = vld [vmem:[#allocation2] sm:$0xff]
          %v465 = vld [vmem:[#allocation4] sm:$0xff]
          %v466 = vld [vmem:[#allocation4 + $0x8] sm:$0xff]
          %v467 = vld [vmem:[#allocation4 + $0x10] sm:$0xff]
          %v468 = vld [vmem:[#allocation4 + $0x18] sm:$0xff]
          %v469 = vld [vmem:[#allocation5] sm:$0x1]
          %p470 = scmp.eq.s32.totalorder %s22, 0
          %s471 = scalar_select %p470, 1, 0
          %s472 = scvt.s32.f32 %s471
          %v473 = vstv %s472
          %v474 = vmul.f32 %v469, %v473
          %v476 = vperm.slane %v474, 0
          %v479 = vsel %vm451, %v464, 0
          %481 = vmatpush.msra.mxu0 0.0
          %482 = vmatpush.msra.mxu0 0.0
          %483 = vmatpush.msra.mxu0 0.0
          %484 = vmatpush.msra.mxu0 0.0
          %485 = vmatpush.msra.mxu0 0.0
          %486 = vmatpush.msra.mxu0 0.0
          %487 = vmatpush.msra.mxu0 0.0
          %488 = vmatpush.msra.mxu0 0.0
          %489 = vmatpush.msra.mxu0 0.0
          %490 = vmatpush.msra.mxu0 0.0
          %491 = vmatpush.msra.mxu0 0.0
          %492 = vmatpush.msra.mxu0 0.0
          %493 = vmatpush.msra.mxu0 %v468
          %494 = vmatpush.msra.mxu0 %v467
          %495 = vmatpush.msra.mxu0 %v466
          %496 = vmatpush.msra.mxu0 %v465
          %497 = vmatmul.f32.gmra.mxu0 %v479
          %v498 = vpop.f32.mrf.mxu0
          %v499 = vadd.f32 %v476, %v498
          %500 = vdwg.mxu0
          %501 = vst [vmem:[%s204] sm:$0xff] %v499
        $region85: #{tpu_custom_call.1} parent=27 // pred_fallthru
          _
        %s502 = sand.u32 %s102, 1
        %s503 = scalar_lea.sflag [#allocation8], %s502
        %s504 = sand.u32 %s102, 1
        %s505 = smul.addr %s504, 8
        %s506 = scalar_lea.vmem [#allocation7], %s505
        // Predicated region
        $region86: #{tpu_custom_call.1} parent=27 // pred_check
          %p507 = pneg %p112
        $region87: #{tpu_custom_call.1} parent=27 // pred_check_branch
          %509 = sbr.rel (%p507) target = $region89
        $region88: #{tpu_custom_call.1} parent=27 // pred_region
          %511 = vsyncadd %s503, 0
          %s512 = smul.addr %s22, 8
          %s513 = scalar_lea.hbm %s4, %s512
          %s515 = sshll.u32 %s506, 4
          %s516 = int_to_ptr.vmem [resolvable:$true] %s515
          %s517 = sshll.u32 %s513, 4
          %s518 = int_to_ptr.hbm [resolvable:$true] %s517
          %520 = dma.vmem_to_hbm [thread:$0]  %s516, 128, %s518, %s503
        $region89: #{tpu_custom_call.1} parent=27 // pred_fallthru
          _
      $region28: #{tpu_custom_call.1} parent=5 // pred_fallthru
        _
      %p521 = scmp.le.s32.totalorder 2, %s13
      // Predicated region
      $region90: #{tpu_custom_call.1} parent=5 // pred_check
        %p522 = pneg %p521
      $region91: #{tpu_custom_call.1} parent=5 // pred_check_branch
        %524 = sbr.rel (%p522) target = $region93
      $region92: #{tpu_custom_call.1} parent=5 // pred_region
        %s525 = ssub.s32 %s13, 2
        // Predicated region
        $region94: #{tpu_custom_call.1} parent=92 // pred_check
          %p526 = pneg %p118
        $region95: #{tpu_custom_call.1} parent=92 // pred_check_branch
          %528 = sbr.rel (%p526) target = $region97
        $region96: #{tpu_custom_call.1} parent=92 // pred_region
          %s529 = sand.u32 %s103, 1
          %s530 = scalar_lea.sflag [#allocation8], %s529
          %s531 = sand.u32 %s103, 1
          %s532 = smul.addr %s531, 8
          %s533 = scalar_lea.vmem [#allocation7], %s532
          %535 = dma.done %s530, 128
        $region97: #{tpu_custom_call.1} parent=92 // pred_fallthru
          _
      $region93: #{tpu_custom_call.1} parent=5 // pred_fallthru
        _
    $region6: #{tpu_custom_call.1} parent=1 // loop_footer
      %s17 = sadd.s32 1, %s13
    $region7: #{tpu_custom_call.1} parent=1 // loop_footer_branch
      %12 = sbr.rel target = $region3
    $region8: #{tpu_custom_call.1} parent=1 // loop_exit
      _
    %536 = vsyncpa [#allocation8], 1
    %s537 = scalar_lea.sflag [#allocation8], 1
    %538 = vsyncpa %s537, 1
  %539 = vsyncmov [#allocation6]
  %s540 = vpop.sfrf %539
  %p541 = scmp.eq.s32.totalorder %s540, 0
  %p542 = pneg %p541
  %544 = shalt.err (%p542)
  %s545 = scalar_lea.sflag [#allocation6], 1
  %546 = vsyncmov %s545
  %s547 = vpop.sfrf %546
  %p548 = scmp.eq.s32.totalorder %s547, 0
  %p549 = pneg %p548
  %551 = shalt.err (%p549)

</llo_original>
